<compile_context>
chip_gen: v7x
topology: tpu7x:2x2x1
jax: 0.10.0
libtpu: 0.0.40
codegen_flags: <defaults>
</compile_context>

<pallas_src>
import functools
import math

import jax
import jax.numpy as jnp
from jax.experimental import pallas as pl
from jax.experimental.pallas import tpu as pltpu

_LN_EPS = 1e-6  # Block uses nn.LayerNorm(dim, eps=1e-06)


def _layernorm_f32(x, gamma, beta, eps=_LN_EPS):
    mu = jnp.mean(x, axis=-1, keepdims=True)
    var = jnp.mean((x - mu) ** 2, axis=-1, keepdims=True)
    return (x - mu) * jax.lax.rsqrt(var + eps) * gamma + beta


def _seq_tile(n, target=128):
    """Largest multiple-of-8 divisor of n that is <= target (or n itself)."""
    if n <= target:
        return n
    t = (target // 8) * 8
    while t >= 8:
        if n % t == 0:
            return t
        t -= 8
    return n


# ---------------------------------------------------------------------------
# Kernel 1: LayerNorm1 + fused QKV projection.   grid = (B, N // TN)
# ---------------------------------------------------------------------------
def _ln_qkv_kernel(x_ref, g_ref, b_ref, wqkv_ref, bqkv_ref,
                   q_ref, k_ref, v_ref, *, n_heads):
    x = x_ref[0].astype(jnp.float32)                                   # (TN, D)
    xn = _layernorm_f32(x, g_ref[...].astype(jnp.float32),
                        b_ref[...].astype(jnp.float32))
    # One wide matmul (TN, D) x (D, 3D); bf16 inputs, f32 accumulation.
    y = jnp.dot(xn.astype(wqkv_ref.dtype), wqkv_ref[...],
                preferred_element_type=jnp.float32) + bqkv_ref[...]    # (TN, 3D)
    d = y.shape[-1] // 3
    hd = d // n_heads
    for h in range(n_heads):                 # static: split heads once, at write time
        q_ref[0, h] = y[:, h * hd:(h + 1) * hd].astype(q_ref.dtype)
        k_ref[0, h] = y[:, d + h * hd:d + (h + 1) * hd].astype(k_ref.dtype)
        v_ref[0, h] = y[:, 2 * d + h * hd:2 * d + (h + 1) * hd].astype(v_ref.dtype)


# ---------------------------------------------------------------------------
# Kernel 2: flash attention (all heads batched).  grid = (B, N//TQ, N//TK)
#   * scale already folded into q (weights pre-scaled in the wrapper)
#   * epilogue merges heads -> lane-dense (TQ, D) output block
# ---------------------------------------------------------------------------
def _flash_attn_kernel(q_ref, k_ref, v_ref, o_ref, m_sc, l_sc, acc_sc, *, n_heads):
    ki = pl.program_id(2)

    @pl.when(ki == 0)
    def _():
        m_sc[...] = jnp.full_like(m_sc[...], -jnp.inf)
        l_sc[...] = jnp.zeros_like(l_sc[...])
        acc_sc[...] = jnp.zeros_like(acc_sc[...])

    q = q_ref[0]                                                       # (H, TQ, hd)
    k = k_ref[0]                                                       # (H, TK, hd)
    v = v_ref[0]                                                       # (H, TK, hd)

    # One batched MXU contraction over all heads; accumulate in f32.
    s = jnp.einsum("hqd,hkd->hqk", q, k,
                   preferred_element_type=jnp.float32)                 # (H, TQ, TK)

    m_prev = m_sc[...]
    m_new = jnp.maximum(m_prev, s.max(axis=-1, keepdims=True))
    alpha = jnp.exp(m_prev - m_new)
    p = jnp.exp(s - m_new)
    l_sc[...] = alpha * l_sc[...] + p.sum(axis=-1, keepdims=True)
    acc_sc[...] = alpha * acc_sc[...] + jnp.einsum(
        "hqk,hkd->hqd", p.astype(v.dtype), v, preferred_element_type=jnp.float32)
    m_sc[...] = m_new

    @pl.when(ki == pl.num_programs(2) - 1)
    def _():
        inv_l = pl.reciprocal(l_sc[...], approx=True)   # EUP slot, off the VALU path
        ctx = acc_sc[...] * inv_l                                       # (H, TQ, hd)
        # Merge heads -> (TQ, D): lane-dense store (== torch transpose(1,2).flatten(2)).
        merged = jnp.concatenate([ctx[h] for h in range(n_heads)], axis=-1)
        o_ref[0] = merged.astype(o_ref.dtype)


# ---------------------------------------------------------------------------
# Kernel 3: proj + residual + LN2 + MLP(GELU) + residual.  grid = (B, N // TN)
# ---------------------------------------------------------------------------
def _proj_mlp_kernel(x_ref, c_ref,
                     wp_ref, bp_ref, g2_ref, b2_ref,
                     w1_ref, b1_ref, w2_ref, b2m_ref,
                     o_ref):
    x = x_ref[0].astype(jnp.float32)                                   # (TN, D)
    ctx = c_ref[0]                                                     # (TN, D), lane-dense
    attn_out = jnp.dot(ctx, wp_ref[...],
                       preferred_element_type=jnp.float32) + bp_ref[...]
    x1 = x + attn_out                                                  # residual 1

    x1n = _layernorm_f32(x1, g2_ref[...].astype(jnp.float32),
                         b2_ref[...].astype(jnp.float32))
    h = jnp.dot(x1n.astype(w1_ref.dtype), w1_ref[...],
                preferred_element_type=jnp.float32) + b1_ref[...]
    # exact (erf-based) GELU, matching torch.nn.GELU() default
    h = 0.5 * h * (1.0 + jax.lax.erf(h * (1.0 / math.sqrt(2.0))))
    y = jnp.dot(h.astype(w2_ref.dtype), w2_ref[...],
                preferred_element_type=jnp.float32) + b2m_ref[...]
    o_ref[0] = (x1 + y).astype(o_ref.dtype)                            # residual 2


# ---------------------------------------------------------------------------
# Wrapper
# ---------------------------------------------------------------------------
def _const_spec(shape):
    nd = len(shape)
    return pl.BlockSpec(shape, lambda *_: (0,) * nd)


def _sum_bytes(entries):
    total = 0
    for shape, dt in entries:
        n = 1
        for s in shape:
            n *= int(s)
        total += n * jnp.dtype(dt).itemsize
    return total


def _vmem_limit(block_bytes, scratch_bytes=0):
    # blocks are (at most) double-buffered by the pipeline; add headroom for scratch/spills
    est = 2 * block_bytes + scratch_bytes + (4 << 20)
    return int(min(max(est, 32 << 20), 100 << 20))


def block_forward(x, params, *, n_heads, compute_dtype=jnp.bfloat16,
                  q_tile=128, kv_tile=128):
    B, N, D = x.shape
    assert D % n_heads == 0
    hd = D // n_heads
    hidden = params["w1"].shape[1]
    scale = hd ** (-0.5)
    f32 = jnp.float32
    cd = compute_dtype

    tn = _seq_tile(N, q_tile)
    tq = tn
    tk = _seq_tile(N, kv_tile)

    # Fold the softmax scale into the q-projection (one-time weight preprocess in f32,
    # mathematically identical; removes the per-score multiply in the attention loop).
    wqkv = params["wqkv"].at[:, :D].multiply(scale).astype(cd)
    bqkv = params["bqkv"].at[:, :D].multiply(scale).astype(f32)
    wp = params["wp"].astype(cd)
    w1 = params["w1"].astype(cd)
    w2 = params["w2"].astype(cd)

    head_block = (1, n_heads, tn, hd)

    # ---------------- call 1: LN1 + QKV ----------------
    qkv_bytes = _sum_bytes(
        [((1, tn, D), x.dtype), ((1, D), f32), ((1, D), f32),
         ((D, 3 * D), cd), ((1, 3 * D), f32)] + [(head_block, cd)] * 3)
    q, k, v = pl.pallas_call(
        functools.partial(_ln_qkv_kernel, n_heads=n_heads),
        out_shape=tuple(jax.ShapeDtypeStruct((B, n_heads, N, hd), cd) for _ in range(3)),
        grid_spec=pltpu.PrefetchScalarGridSpec(
            num_scalar_prefetch=0,
            grid=(B, N // tn),
            in_specs=[
                pl.BlockSpec((1, tn, D), lambda b, i: (b, i, 0)),
                _const_spec((1, D)), _const_spec((1, D)),
                _const_spec((D, 3 * D)), _const_spec((1, 3 * D)),
            ],
            out_specs=[pl.BlockSpec(head_block, lambda b, i: (b, 0, i, 0))
                       for _ in range(3)],
        ),
        compiler_params=pltpu.CompilerParams(
            dimension_semantics=("parallel", "parallel"),
            vmem_limit_bytes=_vmem_limit(qkv_bytes)),
    )(x, params["g1"], params["b1"], wqkv, bqkv)

    # ---------------- call 2: flash attention (lane-dense (B, N, D) output) ----------------
    q_block = (1, n_heads, tq, hd)
    kv_block = (1, n_heads, tk, hd)
    o_block = (1, tq, D)
    attn_bytes = _sum_bytes([(q_block, cd), (kv_block, cd), (kv_block, cd), (o_block, cd)])
    attn_scratch = _sum_bytes([((n_heads, tq, 1), f32)] * 2 + [((n_heads, tq, hd), f32)])
    ctx = pl.pallas_call(
        functools.partial(_flash_attn_kernel, n_heads=n_heads),
        out_shape=jax.ShapeDtypeStruct((B, N, D), cd),
        grid_spec=pltpu.PrefetchScalarGridSpec(
            num_scalar_prefetch=0,
            grid=(B, N // tq, N // tk),
            in_specs=[
                pl.BlockSpec(q_block, lambda b, qi, ki: (b, 0, qi, 0)),
                pl.BlockSpec(kv_block, lambda b, qi, ki: (b, 0, ki, 0)),
                pl.BlockSpec(kv_block, lambda b, qi, ki: (b, 0, ki, 0)),
            ],
            out_specs=pl.BlockSpec(o_block, lambda b, qi, ki: (b, qi, 0)),
            scratch_shapes=[
                pltpu.VMEM((n_heads, tq, 1), f32),      # running max
                pltpu.VMEM((n_heads, tq, 1), f32),      # running denom
                pltpu.VMEM((n_heads, tq, hd), f32),     # context accumulator
            ],
        ),
        compiler_params=pltpu.CompilerParams(
            dimension_semantics=("parallel", "parallel", "arbitrary"),
            vmem_limit_bytes=_vmem_limit(attn_bytes, attn_scratch)),
    )(q, k, v)

    # ---------------- call 3: proj + residual + LN2 + MLP ----------------
    mlp_bytes = _sum_bytes([
        ((1, tn, D), x.dtype), ((1, tn, D), cd),
        ((D, D), cd), ((1, D), f32), ((1, D), f32), ((1, D), f32),
        ((D, hidden), cd), ((1, hidden), f32), ((hidden, D), cd), ((1, D), f32),
        ((1, tn, D), x.dtype),
    ])
    out = pl.pallas_call(
        _proj_mlp_kernel,
        out_shape=jax.ShapeDtypeStruct((B, N, D), x.dtype),
        grid_spec=pltpu.PrefetchScalarGridSpec(
            num_scalar_prefetch=0,
            grid=(B, N // tn),
            in_specs=[
                pl.BlockSpec((1, tn, D), lambda b, i: (b, i, 0)),
                pl.BlockSpec((1, tn, D), lambda b, i: (b, i, 0)),
                _const_spec((D, D)), _const_spec((1, D)),
                _const_spec((1, D)), _const_spec((1, D)),
                _const_spec((D, hidden)), _const_spec((1, hidden)),
                _const_spec((hidden, D)), _const_spec((1, D)),
            ],
            out_specs=pl.BlockSpec((1, tn, D), lambda b, i: (b, i, 0)),
        ),
        compiler_params=pltpu.CompilerParams(
            dimension_semantics=("parallel", "parallel"),
            vmem_limit_bytes=_vmem_limit(mlp_bytes)),
    )(x, ctx, wp, params["bp"].astype(f32), params["g2"], params["b2"],
      w1, params["bb1"].astype(f32), w2, params["bb2"].astype(f32))
    return out


# ---------------------------------------------------------------------------
# Pure-JAX reference of Block.forward (dropout p=0 -> identity) and params
# ---------------------------------------------------------------------------
def block_reference(x, params, *, n_heads):
    B, N, D = x.shape
    hd = D // n_heads
    scale = hd ** (-0.5)

    xn = _layernorm_f32(x, params["g1"], params["b1"])
    qkv = xn @ params["wqkv"] + params["bqkv"]                    # (B, N, 3D)
    qkv = qkv.reshape(B, N, 3, n_heads, hd).transpose(2, 0, 3, 1, 4)
    q, k, v = qkv[0], qkv[1], qkv[2]                              # (B, h, N, hd)
    s = jnp.einsum("bhqd,bhkd->bhqk", q, k) * scale
    attn = jax.nn.softmax(s, axis=-1)
    ctx = jnp.einsum("bhqk,bhkd->bhqd", attn, v)
    ctx = ctx.transpose(0, 2, 1, 3).reshape(B, N, D)
    x1 = x + ctx @ params["wp"] + params["bp"]

    x1n = _layernorm_f32(x1, params["g2"], params["b2"])
    h = jax.nn.gelu(x1n @ params["w1"] + params["bb1"], approximate=False)
    return x1 + h @ params["w2"] + params["bb2"]


def init_params(key, dim, n_heads, mlp_ratio=4.0):
    H = int(dim * mlp_ratio)
    ks = jax.random.split(key, 8)
    f = jnp.float32
    s = 0.02
    return {
        "g1": jnp.ones((1, dim), f), "b1": jnp.zeros((1, dim), f),
        "wqkv": s * jax.random.normal(ks[0], (dim, 3 * dim), f),
        "bqkv": s * jax.random.normal(ks[1], (1, 3 * dim), f),
        "wp": s * jax.random.normal(ks[2], (dim, dim), f),
        "bp": s * jax.random.normal(ks[3], (1, dim), f),
        "g2": jnp.ones((1, dim), f), "b2": jnp.zeros((1, dim), f),
        "w1": s * jax.random.normal(ks[4], (dim, H), f),
        "bb1": s * jax.random.normal(ks[5], (1, H), f),
        "w2": s * jax.random.normal(ks[6], (H, dim), f),
        "bb2": s * jax.random.normal(ks[7], (1, dim), f),
    }


if __name__ == "__main__":
    B, N, D, n_heads = 2, 8, 32, 4
    key = jax.random.PRNGKey(0)
    kx, kp = jax.random.split(key)
    x = jax.random.normal(kx, (B, N, D), jnp.float32)
    params = init_params(kp, D, n_heads, mlp_ratio=4.0)

    ref = block_reference(x, params, n_heads=n_heads)

    # f32 compute path: tight check (only approx-reciprocal / accumulation-order noise).
    out_f32 = jax.block_until_ready(
        block_forward(x, params, n_heads=n_heads, compute_dtype=jnp.float32))
    assert out_f32.shape == (B, N, D)
    assert jnp.allclose(out_f32, ref, atol=5e-4, rtol=5e-4), "f32 mismatch vs reference"

    # bf16 compute path (production config): loose check against the f32 reference.
    out_bf16 = jax.block_until_ready(
        block_forward(x, params, n_heads=n_heads, compute_dtype=jnp.bfloat16))
    assert out_bf16.shape == (B, N, D)
    assert jnp.allclose(out_bf16, ref, atol=2e-2, rtol=2e-2), "bf16 mismatch vs reference"

    print("KERNEL_OK")
</pallas_src>

<mosaic_0001>
module attributes {stable_mosaic.version = 11 : i64} {
  func.func @_ln_qkv_kernel(%arg0: i32, %arg1: i32, %arg2: memref<1x8x32xf32, #tpu.memory_space<vmem>>, %arg3: memref<1x32xf32, #tpu.memory_space<vmem>>, %arg4: memref<1x32xf32, #tpu.memory_space<vmem>>, %arg5: memref<32x96xf32, #tpu.memory_space<vmem>>, %arg6: memref<1x96xf32, #tpu.memory_space<vmem>>, %arg7: memref<1x4x8x8xf32, #tpu.memory_space<vmem>>, %arg8: memref<1x4x8x8xf32, #tpu.memory_space<vmem>>, %arg9: memref<1x4x8x8xf32, #tpu.memory_space<vmem>>) attributes {dimension_semantics = [#tpu.dimension_semantics<parallel>, #tpu.dimension_semantics<parallel>], iteration_bounds = array<i64: 2, 1>, scalar_prefetch = 0 : i64, scratch_operands = 0 : i64, tpu.core_type = #tpu.core_type<tc>, window_params = [{transform_indices = @transform_0, window_bounds = array<i64: 1, 8, 32>}, {pipeline_mode = #tpu.pipeline_mode<synchronous>, transform_indices = @transform_1, window_bounds = array<i64: 1, 32>}, {pipeline_mode = #tpu.pipeline_mode<synchronous>, transform_indices = @transform_2, window_bounds = array<i64: 1, 32>}, {pipeline_mode = #tpu.pipeline_mode<synchronous>, transform_indices = @transform_3, window_bounds = array<i64: 32, 96>}, {pipeline_mode = #tpu.pipeline_mode<synchronous>, transform_indices = @transform_4, window_bounds = array<i64: 1, 96>}, {transform_indices = @transform_5, window_bounds = array<i64: 1, 4, 8, 8>}, {transform_indices = @transform_6, window_bounds = array<i64: 1, 4, 8, 8>}, {transform_indices = @transform_7, window_bounds = array<i64: 1, 4, 8, 8>}]} {
    %c0 = arith.constant 0 : index
    %c0_0 = arith.constant 0 : index
    %c0_1 = arith.constant 0 : index
    %0 = vector.load %arg2[%c0, %c0_0, %c0_1] : memref<1x8x32xf32, #tpu.memory_space<vmem>>, vector<1x8x32xf32>
    %1 = vector.shape_cast %0 : vector<1x8x32xf32> to vector<8x32xf32>
    %c0_2 = arith.constant 0 : index
    %c0_3 = arith.constant 0 : index
    %2 = vector.load %arg3[%c0_2, %c0_3] : memref<1x32xf32, #tpu.memory_space<vmem>>, vector<1x32xf32>
    %c0_4 = arith.constant 0 : index
    %c0_5 = arith.constant 0 : index
    %3 = vector.load %arg4[%c0_4, %c0_5] : memref<1x32xf32, #tpu.memory_space<vmem>>, vector<1x32xf32>
    %cst = arith.constant dense<0.000000e+00> : vector<8xf32>
    %4 = vector.multi_reduction <add>, %1, %cst [1] : vector<8x32xf32> to vector<8xf32>
    %5 = vector.shape_cast %4 : vector<8xf32> to vector<8x1xf32>
    %cst_6 = arith.constant 3.200000e+01 : f32
    %6 = vector.broadcast %cst_6 : f32 to vector<8x1xf32>
    %7 = arith.divf %5, %6 : vector<8x1xf32>
    %8 = vector.broadcast %7 : vector<8x1xf32> to vector<8x32xf32>
    %9 = arith.subf %1, %8 : vector<8x32xf32>
    %10 = arith.mulf %9, %9 : vector<8x32xf32>
    %cst_7 = arith.constant dense<0.000000e+00> : vector<8xf32>
    %11 = vector.multi_reduction <add>, %10, %cst_7 [1] : vector<8x32xf32> to vector<8xf32>
    %12 = vector.shape_cast %11 : vector<8xf32> to vector<8x1xf32>
    %cst_8 = arith.constant 3.200000e+01 : f32
    %13 = vector.broadcast %cst_8 : f32 to vector<8x1xf32>
    %14 = arith.divf %12, %13 : vector<8x1xf32>
    %15 = vector.broadcast %7 : vector<8x1xf32> to vector<8x32xf32>
    %16 = arith.subf %1, %15 : vector<8x32xf32>
    %cst_9 = arith.constant 9.99999997E-7 : f32
    %17 = vector.broadcast %cst_9 : f32 to vector<8x1xf32>
    %18 = arith.addf %14, %17 : vector<8x1xf32>
    %19 = math.rsqrt %18 : vector<8x1xf32>
    %20 = vector.broadcast %19 : vector<8x1xf32> to vector<8x32xf32>
    %21 = arith.mulf %16, %20 : vector<8x32xf32>
    %22 = vector.broadcast %2 : vector<1x32xf32> to vector<8x32xf32>
    %23 = arith.mulf %21, %22 : vector<8x32xf32>
    %24 = vector.broadcast %3 : vector<1x32xf32> to vector<8x32xf32>
    %25 = arith.addf %23, %24 : vector<8x32xf32>
    %c0_10 = arith.constant 0 : index
    %c0_11 = arith.constant 0 : index
    %26 = vector.load %arg5[%c0_10, %c0_11] : memref<32x96xf32, #tpu.memory_space<vmem>>, vector<32x96xf32>
    %cst_12 = arith.constant dense<0.000000e+00> : vector<8x96xf32>
    %27 = tpu.matmul %25, %26, %cst_12 {dimension_numbers = #tpu.dot_dimension_numbers<[1], [0], [0], [1], [0, 0, 1, 1], [], []>} : vector<8x32xf32>, vector<32x96xf32>, vector<8x96xf32> -> vector<8x96xf32>
    %c0_13 = arith.constant 0 : index
    %c0_14 = arith.constant 0 : index
    %28 = vector.load %arg6[%c0_13, %c0_14] : memref<1x96xf32, #tpu.memory_space<vmem>>, vector<1x96xf32>
    %29 = vector.broadcast %28 : vector<1x96xf32> to vector<8x96xf32>
    %30 = arith.addf %27, %29 : vector<8x96xf32>
    %31 = vector.extract_strided_slice %30 {offsets = [0, 0], sizes = [8, 8], strides = [1, 1]} : vector<8x96xf32> to vector<8x8xf32>
    %c0_15 = arith.constant 0 : index
    %c0_16 = arith.constant 0 : index
    %c0_17 = arith.constant 0 : index
    %c0_18 = arith.constant 0 : index
    %32 = vector.load %arg7[%c0_15, %c0_16, %c0_17, %c0_18] : memref<1x4x8x8xf32, #tpu.memory_space<vmem>>, vector<1x1x8x8xf32>
    %33 = vector.shape_cast %32 : vector<1x1x8x8xf32> to vector<8x8xf32>
    %34 = vector.shape_cast %31 : vector<8x8xf32> to vector<1x1x8x8xf32>
    tpu.vector_store %arg7[%c0_15, %c0_16, %c0_17, %c0_18], %34 {strides = array<i32>} : memref<1x4x8x8xf32, #tpu.memory_space<vmem>>, vector<1x1x8x8xf32>,
    %35 = vector.extract_strided_slice %30 {offsets = [0, 32], sizes = [8, 8], strides = [1, 1]} : vector<8x96xf32> to vector<8x8xf32>
    %c0_19 = arith.constant 0 : index
    %c0_20 = arith.constant 0 : index
    %c0_21 = arith.constant 0 : index
    %c0_22 = arith.constant 0 : index
    %36 = vector.load %arg8[%c0_19, %c0_20, %c0_21, %c0_22] : memref<1x4x8x8xf32, #tpu.memory_space<vmem>>, vector<1x1x8x8xf32>
    %37 = vector.shape_cast %36 : vector<1x1x8x8xf32> to vector<8x8xf32>
    %38 = vector.shape_cast %35 : vector<8x8xf32> to vector<1x1x8x8xf32>
    tpu.vector_store %arg8[%c0_19, %c0_20, %c0_21, %c0_22], %38 {strides = array<i32>} : memref<1x4x8x8xf32, #tpu.memory_space<vmem>>, vector<1x1x8x8xf32>,
    %39 = vector.extract_strided_slice %30 {offsets = [0, 64], sizes = [8, 8], strides = [1, 1]} : vector<8x96xf32> to vector<8x8xf32>
    %c0_23 = arith.constant 0 : index
    %c0_24 = arith.constant 0 : index
    %c0_25 = arith.constant 0 : index
    %c0_26 = arith.constant 0 : index
    %40 = vector.load %arg9[%c0_23, %c0_24, %c0_25, %c0_26] : memref<1x4x8x8xf32, #tpu.memory_space<vmem>>, vector<1x1x8x8xf32>
    %41 = vector.shape_cast %40 : vector<1x1x8x8xf32> to vector<8x8xf32>
    %42 = vector.shape_cast %39 : vector<8x8xf32> to vector<1x1x8x8xf32>
    tpu.vector_store %arg9[%c0_23, %c0_24, %c0_25, %c0_26], %42 {strides = array<i32>} : memref<1x4x8x8xf32, #tpu.memory_space<vmem>>, vector<1x1x8x8xf32>,
    %43 = vector.extract_strided_slice %30 {offsets = [0, 8], sizes = [8, 8], strides = [1, 1]} : vector<8x96xf32> to vector<8x8xf32>
    %c0_27 = arith.constant 0 : index
    %c1 = arith.constant 1 : index
    %c0_28 = arith.constant 0 : index
    %c0_29 = arith.constant 0 : index
    %44 = vector.load %arg7[%c0_27, %c1, %c0_28, %c0_29] : memref<1x4x8x8xf32, #tpu.memory_space<vmem>>, vector<1x1x8x8xf32>
    %45 = vector.shape_cast %44 : vector<1x1x8x8xf32> to vector<8x8xf32>
    %46 = vector.shape_cast %43 : vector<8x8xf32> to vector<1x1x8x8xf32>
    tpu.vector_store %arg7[%c0_27, %c1, %c0_28, %c0_29], %46 {strides = array<i32>} : memref<1x4x8x8xf32, #tpu.memory_space<vmem>>, vector<1x1x8x8xf32>,
    %47 = vector.extract_strided_slice %30 {offsets = [0, 40], sizes = [8, 8], strides = [1, 1]} : vector<8x96xf32> to vector<8x8xf32>
    %c0_30 = arith.constant 0 : index
    %c1_31 = arith.constant 1 : index
    %c0_32 = arith.constant 0 : index
    %c0_33 = arith.constant 0 : index
    %48 = vector.load %arg8[%c0_30, %c1_31, %c0_32, %c0_33] : memref<1x4x8x8xf32, #tpu.memory_space<vmem>>, vector<1x1x8x8xf32>
    %49 = vector.shape_cast %48 : vector<1x1x8x8xf32> to vector<8x8xf32>
    %50 = vector.shape_cast %47 : vector<8x8xf32> to vector<1x1x8x8xf32>
    tpu.vector_store %arg8[%c0_30, %c1_31, %c0_32, %c0_33], %50 {strides = array<i32>} : memref<1x4x8x8xf32, #tpu.memory_space<vmem>>, vector<1x1x8x8xf32>,
    %51 = vector.extract_strided_slice %30 {offsets = [0, 72], sizes = [8, 8], strides = [1, 1]} : vector<8x96xf32> to vector<8x8xf32>
    %c0_34 = arith.constant 0 : index
    %c1_35 = arith.constant 1 : index
    %c0_36 = arith.constant 0 : index
    %c0_37 = arith.constant 0 : index
    %52 = vector.load %arg9[%c0_34, %c1_35, %c0_36, %c0_37] : memref<1x4x8x8xf32, #tpu.memory_space<vmem>>, vector<1x1x8x8xf32>
    %53 = vector.shape_cast %52 : vector<1x1x8x8xf32> to vector<8x8xf32>
    %54 = vector.shape_cast %51 : vector<8x8xf32> to vector<1x1x8x8xf32>
    tpu.vector_store %arg9[%c0_34, %c1_35, %c0_36, %c0_37], %54 {strides = array<i32>} : memref<1x4x8x8xf32, #tpu.memory_space<vmem>>, vector<1x1x8x8xf32>,
    %55 = vector.extract_strided_slice %30 {offsets = [0, 16], sizes = [8, 8], strides = [1, 1]} : vector<8x96xf32> to vector<8x8xf32>
    %c0_38 = arith.constant 0 : index
    %c2 = arith.constant 2 : index
    %c0_39 = arith.constant 0 : index
    %c0_40 = arith.constant 0 : index
    %56 = vector.load %arg7[%c0_38, %c2, %c0_39, %c0_40] : memref<1x4x8x8xf32, #tpu.memory_space<vmem>>, vector<1x1x8x8xf32>
    %57 = vector.shape_cast %56 : vector<1x1x8x8xf32> to vector<8x8xf32>
    %58 = vector.shape_cast %55 : vector<8x8xf32> to vector<1x1x8x8xf32>
    tpu.vector_store %arg7[%c0_38, %c2, %c0_39, %c0_40], %58 {strides = array<i32>} : memref<1x4x8x8xf32, #tpu.memory_space<vmem>>, vector<1x1x8x8xf32>,
    %59 = vector.extract_strided_slice %30 {offsets = [0, 48], sizes = [8, 8], strides = [1, 1]} : vector<8x96xf32> to vector<8x8xf32>
    %c0_41 = arith.constant 0 : index
    %c2_42 = arith.constant 2 : index
    %c0_43 = arith.constant 0 : index
    %c0_44 = arith.constant 0 : index
    %60 = vector.load %arg8[%c0_41, %c2_42, %c0_43, %c0_44] : memref<1x4x8x8xf32, #tpu.memory_space<vmem>>, vector<1x1x8x8xf32>
    %61 = vector.shape_cast %60 : vector<1x1x8x8xf32> to vector<8x8xf32>
    %62 = vector.shape_cast %59 : vector<8x8xf32> to vector<1x1x8x8xf32>
    tpu.vector_store %arg8[%c0_41, %c2_42, %c0_43, %c0_44], %62 {strides = array<i32>} : memref<1x4x8x8xf32, #tpu.memory_space<vmem>>, vector<1x1x8x8xf32>,
    %63 = vector.extract_strided_slice %30 {offsets = [0, 80], sizes = [8, 8], strides = [1, 1]} : vector<8x96xf32> to vector<8x8xf32>
    %c0_45 = arith.constant 0 : index
    %c2_46 = arith.constant 2 : index
    %c0_47 = arith.constant 0 : index
    %c0_48 = arith.constant 0 : index
    %64 = vector.load %arg9[%c0_45, %c2_46, %c0_47, %c0_48] : memref<1x4x8x8xf32, #tpu.memory_space<vmem>>, vector<1x1x8x8xf32>
    %65 = vector.shape_cast %64 : vector<1x1x8x8xf32> to vector<8x8xf32>
    %66 = vector.shape_cast %63 : vector<8x8xf32> to vector<1x1x8x8xf32>
    tpu.vector_store %arg9[%c0_45, %c2_46, %c0_47, %c0_48], %66 {strides = array<i32>} : memref<1x4x8x8xf32, #tpu.memory_space<vmem>>, vector<1x1x8x8xf32>,
    %67 = vector.extract_strided_slice %30 {offsets = [0, 24], sizes = [8, 8], strides = [1, 1]} : vector<8x96xf32> to vector<8x8xf32>
    %c0_49 = arith.constant 0 : index
    %c3 = arith.constant 3 : index
    %c0_50 = arith.constant 0 : index
    %c0_51 = arith.constant 0 : index
    %68 = vector.load %arg7[%c0_49, %c3, %c0_50, %c0_51] : memref<1x4x8x8xf32, #tpu.memory_space<vmem>>, vector<1x1x8x8xf32>
    %69 = vector.shape_cast %68 : vector<1x1x8x8xf32> to vector<8x8xf32>
    %70 = vector.shape_cast %67 : vector<8x8xf32> to vector<1x1x8x8xf32>
    tpu.vector_store %arg7[%c0_49, %c3, %c0_50, %c0_51], %70 {strides = array<i32>} : memref<1x4x8x8xf32, #tpu.memory_space<vmem>>, vector<1x1x8x8xf32>,
    %71 = vector.extract_strided_slice %30 {offsets = [0, 56], sizes = [8, 8], strides = [1, 1]} : vector<8x96xf32> to vector<8x8xf32>
    %c0_52 = arith.constant 0 : index
    %c3_53 = arith.constant 3 : index
    %c0_54 = arith.constant 0 : index
    %c0_55 = arith.constant 0 : index
    %72 = vector.load %arg8[%c0_52, %c3_53, %c0_54, %c0_55] : memref<1x4x8x8xf32, #tpu.memory_space<vmem>>, vector<1x1x8x8xf32>
    %73 = vector.shape_cast %72 : vector<1x1x8x8xf32> to vector<8x8xf32>
    %74 = vector.shape_cast %71 : vector<8x8xf32> to vector<1x1x8x8xf32>
    tpu.vector_store %arg8[%c0_52, %c3_53, %c0_54, %c0_55], %74 {strides = array<i32>} : memref<1x4x8x8xf32, #tpu.memory_space<vmem>>, vector<1x1x8x8xf32>,
    %75 = vector.extract_strided_slice %30 {offsets = [0, 88], sizes = [8, 8], strides = [1, 1]} : vector<8x96xf32> to vector<8x8xf32>
    %c0_56 = arith.constant 0 : index
    %c3_57 = arith.constant 3 : index
    %c0_58 = arith.constant 0 : index
    %c0_59 = arith.constant 0 : index
    %76 = vector.load %arg9[%c0_56, %c3_57, %c0_58, %c0_59] : memref<1x4x8x8xf32, #tpu.memory_space<vmem>>, vector<1x1x8x8xf32>
    %77 = vector.shape_cast %76 : vector<1x1x8x8xf32> to vector<8x8xf32>
    %78 = vector.shape_cast %75 : vector<8x8xf32> to vector<1x1x8x8xf32>
    tpu.vector_store %arg9[%c0_56, %c3_57, %c0_58, %c0_59], %78 {strides = array<i32>} : memref<1x4x8x8xf32, #tpu.memory_space<vmem>>, vector<1x1x8x8xf32>,
    return
  }
  func.func @transform_0(%arg0: i32, %arg1: i32) -> (i32, i32, i32) {
    %c0_i32 = arith.constant 0 : i32
    %c0_i32_0 = arith.constant 0 : i32
    return %arg0, %arg1, %c0_i32 : i32, i32, i32
  }
  func.func @transform_1(%arg0: i32, %arg1: i32) -> (i32, i32) {
    %c0_i32 = arith.constant 0 : i32
    %c0_i32_0 = arith.constant 0 : i32
    %c0_i32_1 = arith.constant 0 : i32
    return %c0_i32, %c0_i32_0 : i32, i32
  }
  func.func @transform_2(%arg0: i32, %arg1: i32) -> (i32, i32) {
    %c0_i32 = arith.constant 0 : i32
    %c0_i32_0 = arith.constant 0 : i32
    %c0_i32_1 = arith.constant 0 : i32
    return %c0_i32, %c0_i32_0 : i32, i32
  }
  func.func @transform_3(%arg0: i32, %arg1: i32) -> (i32, i32) {
    %c0_i32 = arith.constant 0 : i32
    %c0_i32_0 = arith.constant 0 : i32
    %c0_i32_1 = arith.constant 0 : i32
    return %c0_i32, %c0_i32_0 : i32, i32
  }
  func.func @transform_4(%arg0: i32, %arg1: i32) -> (i32, i32) {
    %c0_i32 = arith.constant 0 : i32
    %c0_i32_0 = arith.constant 0 : i32
    %c0_i32_1 = arith.constant 0 : i32
    return %c0_i32, %c0_i32_0 : i32, i32
  }
  func.func @transform_5(%arg0: i32, %arg1: i32) -> (i32, i32, i32, i32) {
    %c0_i32 = arith.constant 0 : i32
    %c0_i32_0 = arith.constant 0 : i32
    %c0_i32_1 = arith.constant 0 : i32
    return %arg0, %c0_i32, %arg1, %c0_i32_0 : i32, i32, i32, i32
  }
  func.func @transform_6(%arg0: i32, %arg1: i32) -> (i32, i32, i32, i32) {
    %c0_i32 = arith.constant 0 : i32
    %c0_i32_0 = arith.constant 0 : i32
    %c0_i32_1 = arith.constant 0 : i32
    return %arg0, %c0_i32, %arg1, %c0_i32_0 : i32, i32, i32, i32
  }
  func.func @transform_7(%arg0: i32, %arg1: i32) -> (i32, i32, i32, i32) {
    %c0_i32 = arith.constant 0 : i32
    %c0_i32_0 = arith.constant 0 : i32
    %c0_i32_1 = arith.constant 0 : i32
    return %arg0, %c0_i32, %arg1, %c0_i32_0 : i32, i32, i32, i32
  }
}

</mosaic_0001>

<llo_original>
// kernel: tpu_custom_call.1
$region0: #{tpu_custom_call.1}
  #allocation0 [shape = 'u32[]', space=smem, size = 0x4, offset = 0x4, fixed_abs, tag = 'smem constant byte address 0x4 - core index']
  #allocation1 [shape = 'u32[144,128]{1,0:T(1,128)}', space=vmem, size = 0x12000, scoped, tag = 'internal scratch']
  %s0 = inlined_call_operand.hbm [shape: f32[2,8,32], index: 0, kind: input, shape index: {}]
  %s1 = inlined_call_operand.vmem [shape: f32[1,32], index: 1, kind: input, shape index: {}]
  %s2 = inlined_call_operand.vmem [shape: f32[1,32], index: 2, kind: input, shape index: {}]
  %s3 = inlined_call_operand.hbm [shape: f32[32,96], index: 3, kind: input, shape index: {}]
  %s4 = inlined_call_operand.vmem [shape: f32[1,96], index: 4, kind: input, shape index: {}]
  %s5 = inlined_call_operand.hbm [shape: f32[2,4,8,8], index: 5, kind: output, shape index: {0}]
  %s6 = inlined_call_operand.hbm [shape: f32[2,4,8,8], index: 6, kind: output, shape index: {1}]
  %s7 = inlined_call_operand.hbm [shape: f32[2,4,8,8], index: 7, kind: output, shape index: {2}]
  %8 = xla_tuple %s5, %s6, %s7
  %s9 = sld [smem:[#allocation0]]
  $region77: #{tpu_custom_call.1} parent=0
    _
  %s11 = ssub.s32 1, %s9
  %s12 = scalar_select 0, %s11, %s9
  $region1: #{tpu_custom_call.1} parent=0
    #allocation2 [shape = 'u8[8192]{0}', space=vmem, size = 0x2000, scoped, tag = 'input window, operand 0']
    #allocation3 [shape = 's32[2]{0}', space=sflag, size = 0x8, scoped, tag = 'scoped memory for tpu_custom_call.1']
    #allocation4 [shape = 's32[2]{0}', space=sflag, size = 0x8, scoped, tag = 'scoped memory for tpu_custom_call.1']
    #allocation5 [shape = 'u8[16384]{0}', space=vmem, size = 0x4000, scoped, tag = 'input window, operand 3, single buffered']
    #allocation6 [shape = 's32[1]{0}', space=sflag, size = 0x4, scoped, tag = 'scoped memory for tpu_custom_call.1']
    #allocation7 [shape = 'u8[32768]{0}', space=vmem, size = 0x8000, scoped, tag = 'output window, operand 0']
    #allocation8 [shape = 'u8[32768]{0}', space=vmem, size = 0x8000, scoped, tag = 'output window, operand 1']
    #allocation9 [shape = 's32[2]{0}', space=sflag, size = 0x8, scoped, tag = 'scoped memory for tpu_custom_call.1']
    #allocation10 [shape = 'u8[32768]{0}', space=vmem, size = 0x8000, scoped, tag = 'output window, operand 2']
    %13 = vsyncpa [#allocation3], 0
    %s14 = scalar_lea.sflag [#allocation3], 1
    %15 = vsyncpa %s14, 0
    %16 = vsyncpa [#allocation6], 0
    %17 = vsyncpa [#allocation4], 0
    %s18 = scalar_lea.sflag [#allocation4], 1
    %19 = vsyncpa %s18, 0
    %20 = vsyncpa [#allocation9], 0
    %s21 = scalar_lea.sflag [#allocation9], 1
    %22 = vsyncpa %s21, 0
    loop: start=0, step=1, limit=4
    $region2: #{tpu_custom_call.1} parent=1 // loop_pre_header
      _
    $region3: #{tpu_custom_call.1} parent=1 // loop_header
      %s24 = sphi 0, %s28
      %p25 = scmp.ge.s32.totalorder %s24, 4
      %s31 = sphi 0, %s43
      %s32 = sphi 0, %s39
      %s33 = sphi 0, %s31
      %s34 = sphi 0, %s32
      %s35 = sphi 0, %s33
      %s36 = sphi 0, %s34
      %s48 = sphi 0, %s50
      %s51 = sphi 0, %s48
      %s52 = sphi 0, %s51
      %s68 = sphi 0, %s52
      %s72 = sphi 0, %s72
      %s74 = sphi 0, %s72
      %s75 = sphi 0, %s74
      %s89 = sphi 0, %s75
      %s93 = sphi 0, %s93
      %s95 = sphi 0, %s93
      %s96 = sphi 0, %s95
      %s110 = sphi 0, %s96
      %s114 = sphi 0, %s114
      %s116 = sphi 0, %s114
      %s117 = sphi 0, %s116
      %s131 = sphi 0, %s117
      %s135 = sphi 0, %s135
      %s137 = sphi 0, %s135
      %s138 = sphi 0, %s137
      %s152 = sphi 0, %s138
      %s160 = sphi 0, %s162
      %s163 = sphi 0, %s160
      %s164 = sphi 0, %s163
      %s180 = sphi 0, %s164
      %s188 = sphi 0, %s190
      %s191 = sphi 0, %s188
      %s192 = sphi 0, %s191
      %s208 = sphi 0, %s192
      %s216 = sphi 0, %s218
      %s219 = sphi 0, %s216
      %s220 = sphi 0, %s219
      %s236 = sphi 0, %s220
    $region4: #{tpu_custom_call.1} parent=1 // loop_header_branch
      %27 = sbr.rel (%p25) target = $region8
    $region5: #{tpu_custom_call.1} parent=1 // loop_body
      %s29 = ssub.s32 %s24, 1
      %s30 = ssub.s32 %s24, 2
      %s37 = sadd.s32 1, %s32
      %p38 = scmp.ge.s32.totalorder %s37, 1
      %s39 = scalar_select %p38, 0, %s37
      %s40 = sadd.s32 1, %s31
      %s41 = scalar_select %p38, %s40, %s31
      %p42 = scmp.ge.s32.totalorder %s41, 2
      %s43 = scalar_select %p42, 0, %s41
      %s44 = ssub.s32 %s31, %s43
      %s45 = ssub.s32 %s32, %s39
      %s46 = sor.u32 %s44, %s45
      %p47 = scmp.eq.s32.totalorder %s46, 0
      %s49 = sadd.s32 %s48, 1
      %s50 = scalar_select %p47, %s48, %s49
      %p53 = pneg %p47
      %p54 = scmp.eq.s32.totalorder %s24, 1
      %p55 = por %p53, %p54
      %p56 = scmp.ne.s32.totalorder %s48, %s51
      %p57 = scmp.eq.s32.totalorder %s24, 0
      %p58 = por %p56, %p57
      %p59 = scmp.ne.s32.totalorder %s48, %s51
      %p60 = scmp.eq.s32.totalorder %s29, 1
      %p61 = por %p59, %p60
      %p62 = scmp.ne.s32.totalorder %s51, %s52
      %p63 = scmp.eq.s32.totalorder %s29, 0
      %p64 = por %p62, %p63
      %p65 = scmp.ne.s32.totalorder %s51, %s52
      %p66 = scmp.eq.s32.totalorder %s30, 1
      %p67 = por %p65, %p66
      %p69 = scmp.ne.s32.totalorder %s52, %s68
      %p70 = scmp.eq.s32.totalorder %s30, 0
      %p71 = por %p69, %p70
      %s73 = sadd.s32 %s72, 1
      %p76 = scmp.eq.s32.totalorder %s24, 1
      %p77 = scmp.ne.s32.totalorder %s72, %s74
      %p78 = scmp.eq.s32.totalorder %s24, 0
      %p79 = por %p77, %p78
      %p80 = scmp.ne.s32.totalorder %s72, %s74
      %p81 = scmp.eq.s32.totalorder %s29, 1
      %p82 = por %p80, %p81
      %p83 = scmp.ne.s32.totalorder %s74, %s75
      %p84 = scmp.eq.s32.totalorder %s29, 0
      %p85 = por %p83, %p84
      %p86 = scmp.ne.s32.totalorder %s74, %s75
      %p87 = scmp.eq.s32.totalorder %s30, 1
      %p88 = por %p86, %p87
      %p90 = scmp.ne.s32.totalorder %s75, %s89
      %p91 = scmp.eq.s32.totalorder %s30, 0
      %p92 = por %p90, %p91
      %s94 = sadd.s32 %s93, 1
      %p97 = scmp.eq.s32.totalorder %s24, 1
      %p98 = scmp.ne.s32.totalorder %s93, %s95
      %p99 = scmp.eq.s32.totalorder %s24, 0
      %p100 = por %p98, %p99
      %p101 = scmp.ne.s32.totalorder %s93, %s95
      %p102 = scmp.eq.s32.totalorder %s29, 1
      %p103 = por %p101, %p102
      %p104 = scmp.ne.s32.totalorder %s95, %s96
      %p105 = scmp.eq.s32.totalorder %s29, 0
      %p106 = por %p104, %p105
      %p107 = scmp.ne.s32.totalorder %s95, %s96
      %p108 = scmp.eq.s32.totalorder %s30, 1
      %p109 = por %p107, %p108
      %p111 = scmp.ne.s32.totalorder %s96, %s110
      %p112 = scmp.eq.s32.totalorder %s30, 0
      %p113 = por %p111, %p112
      %s115 = sadd.s32 %s114, 1
      %p118 = scmp.eq.s32.totalorder %s24, 1
      %p119 = scmp.ne.s32.totalorder %s114, %s116
      %p120 = scmp.eq.s32.totalorder %s24, 0
      %p121 = por %p119, %p120
      %p122 = scmp.ne.s32.totalorder %s114, %s116
      %p123 = scmp.eq.s32.totalorder %s29, 1
      %p124 = por %p122, %p123
      %p125 = scmp.ne.s32.totalorder %s116, %s117
      %p126 = scmp.eq.s32.totalorder %s29, 0
      %p127 = por %p125, %p126
      %p128 = scmp.ne.s32.totalorder %s116, %s117
      %p129 = scmp.eq.s32.totalorder %s30, 1
      %p130 = por %p128, %p129
      %p132 = scmp.ne.s32.totalorder %s117, %s131
      %p133 = scmp.eq.s32.totalorder %s30, 0
      %p134 = por %p132, %p133
      %s136 = sadd.s32 %s135, 1
      %p139 = scmp.eq.s32.totalorder %s24, 1
      %p140 = scmp.ne.s32.totalorder %s135, %s137
      %p141 = scmp.eq.s32.totalorder %s24, 0
      %p142 = por %p140, %p141
      %p143 = scmp.ne.s32.totalorder %s135, %s137
      %p144 = scmp.eq.s32.totalorder %s29, 1
      %p145 = por %p143, %p144
      %p146 = scmp.ne.s32.totalorder %s137, %s138
      %p147 = scmp.eq.s32.totalorder %s29, 0
      %p148 = por %p146, %p147
      %p149 = scmp.ne.s32.totalorder %s137, %s138
      %p150 = scmp.eq.s32.totalorder %s30, 1
      %p151 = por %p149, %p150
      %p153 = scmp.ne.s32.totalorder %s138, %s152
      %p154 = scmp.eq.s32.totalorder %s30, 0
      %p155 = por %p153, %p154
      %s156 = ssub.s32 %s31, %s43
      %s157 = ssub.s32 %s32, %s39
      %s158 = sor.u32 %s156, %s157
      %p159 = scmp.eq.s32.totalorder %s158, 0
      %s161 = sadd.s32 %s160, 1
      %s162 = scalar_select %p159, %s160, %s161
      %p165 = pneg %p159
      %p166 = scmp.eq.s32.totalorder %s24, 1
      %p167 = por %p165, %p166
      %p168 = scmp.ne.s32.totalorder %s160, %s163
      %p169 = scmp.eq.s32.totalorder %s24, 0
      %p170 = por %p168, %p169
      %p171 = scmp.ne.s32.totalorder %s160, %s163
      %p172 = scmp.eq.s32.totalorder %s29, 1
      %p173 = por %p171, %p172
      %p174 = scmp.ne.s32.totalorder %s163, %s164
      %p175 = scmp.eq.s32.totalorder %s29, 0
      %p176 = por %p174, %p175
      %p177 = scmp.ne.s32.totalorder %s163, %s164
      %p178 = scmp.eq.s32.totalorder %s30, 1
      %p179 = por %p177, %p178
      %p181 = scmp.ne.s32.totalorder %s164, %s180
      %p182 = scmp.eq.s32.totalorder %s30, 0
      %p183 = por %p181, %p182
      %s184 = ssub.s32 %s31, %s43
      %s185 = ssub.s32 %s32, %s39
      %s186 = sor.u32 %s184, %s185
      %p187 = scmp.eq.s32.totalorder %s186, 0
      %s189 = sadd.s32 %s188, 1
      %s190 = scalar_select %p187, %s188, %s189
      %p193 = pneg %p187
      %p194 = scmp.eq.s32.totalorder %s24, 1
      %p195 = por %p193, %p194
      %p196 = scmp.ne.s32.totalorder %s188, %s191
      %p197 = scmp.eq.s32.totalorder %s24, 0
      %p198 = por %p196, %p197
      %p199 = scmp.ne.s32.totalorder %s188, %s191
      %p200 = scmp.eq.s32.totalorder %s29, 1
      %p201 = por %p199, %p200
      %p202 = scmp.ne.s32.totalorder %s191, %s192
      %p203 = scmp.eq.s32.totalorder %s29, 0
      %p204 = por %p202, %p203
      %p205 = scmp.ne.s32.totalorder %s191, %s192
      %p206 = scmp.eq.s32.totalorder %s30, 1
      %p207 = por %p205, %p206
      %p209 = scmp.ne.s32.totalorder %s192, %s208
      %p210 = scmp.eq.s32.totalorder %s30, 0
      %p211 = por %p209, %p210
      %s212 = ssub.s32 %s31, %s43
      %s213 = ssub.s32 %s32, %s39
      %s214 = sor.u32 %s212, %s213
      %p215 = scmp.eq.s32.totalorder %s214, 0
      %s217 = sadd.s32 %s216, 1
      %s218 = scalar_select %p215, %s216, %s217
      %p221 = pneg %p215
      %p222 = scmp.eq.s32.totalorder %s24, 1
      %p223 = por %p221, %p222
      %p224 = scmp.ne.s32.totalorder %s216, %s219
      %p225 = scmp.eq.s32.totalorder %s24, 0
      %p226 = por %p224, %p225
      %p227 = scmp.ne.s32.totalorder %s216, %s219
      %p228 = scmp.eq.s32.totalorder %s29, 1
      %p229 = por %p227, %p228
      %p230 = scmp.ne.s32.totalorder %s219, %s220
      %p231 = scmp.eq.s32.totalorder %s29, 0
      %p232 = por %p230, %p231
      %p233 = scmp.ne.s32.totalorder %s219, %s220
      %p234 = scmp.eq.s32.totalorder %s30, 1
      %p235 = por %p233, %p234
      %p237 = scmp.ne.s32.totalorder %s220, %s236
      %p238 = scmp.eq.s32.totalorder %s30, 0
      %p239 = por %p237, %p238
      %p240 = scmp.le.s32.totalorder 1, %s24
      %p241 = scmp.lt.s32.totalorder %s24, 3
      %p242 = pnand %p240, %p241
      %p243 = pneg %p242
      // Predicated region
      $region9: #{tpu_custom_call.1} parent=5 // pred_check
        _
      $region10: #{tpu_custom_call.1} parent=5 // pred_check_branch
        %245 = sbr.rel (%p242) target = $region12
      $region11: #{tpu_custom_call.1} parent=5 // pred_region
        %s246 = ssub.s32 %s24, 1
        // Predicated region
        $region13: #{tpu_custom_call.1} parent=11 // pred_check
          %p247 = pneg %p85
        $region14: #{tpu_custom_call.1} parent=11 // pred_check_branch
          %249 = sbr.rel (%p247) target = $region16
        $region15: #{tpu_custom_call.1} parent=11 // pred_region
          _
        $region16: #{tpu_custom_call.1} parent=11 // pred_fallthru
          _
        // Predicated region
        $region17: #{tpu_custom_call.1} parent=11 // pred_check
          %p250 = pneg %p106
        $region18: #{tpu_custom_call.1} parent=11 // pred_check_branch
          %252 = sbr.rel (%p250) target = $region20
        $region19: #{tpu_custom_call.1} parent=11 // pred_region
          _
        $region20: #{tpu_custom_call.1} parent=11 // pred_fallthru
          _
        // Predicated region
        $region21: #{tpu_custom_call.1} parent=11 // pred_check
          %p253 = pneg %p127
        $region22: #{tpu_custom_call.1} parent=11 // pred_check_branch
          %255 = sbr.rel (%p253) target = $region24
        $region23: #{tpu_custom_call.1} parent=11 // pred_region
          %s257 = ssub.s32 512, 512
          %258 = vsyncadd [#allocation6], %s257
          %s259 = sshll.u32 [#allocation5], 4
          %s260 = int_to_ptr.vmem [resolvable:$true] %s259
          %265 = dma.hbm_to_vmem [thread:$0]  %s3, 512, %s260, [#allocation6], 128, 128, 8
        $region24: #{tpu_custom_call.1} parent=11 // pred_fallthru
          _
        // Predicated region
        $region25: #{tpu_custom_call.1} parent=11 // pred_check
          %p266 = pneg %p148
        $region26: #{tpu_custom_call.1} parent=11 // pred_check_branch
          %268 = sbr.rel (%p266) target = $region28
        $region27: #{tpu_custom_call.1} parent=11 // pred_region
          _
        $region28: #{tpu_custom_call.1} parent=11 // pred_fallthru
          _
      $region12: #{tpu_custom_call.1} parent=5 // pred_fallthru
        _
      %p269 = scmp.lt.s32.totalorder %s24, 2
      // Predicated region
      $region29: #{tpu_custom_call.1} parent=5 // pred_check
        %p270 = pneg %p269
      $region30: #{tpu_custom_call.1} parent=5 // pred_check_branch
        %272 = sbr.rel (%p270) target = $region32
      $region31: #{tpu_custom_call.1} parent=5 // pred_region
        // Predicated region
        $region33: #{tpu_custom_call.1} parent=31 // pred_check
          %p273 = pneg %p58
        $region34: #{tpu_custom_call.1} parent=31 // pred_check_branch
          %275 = sbr.rel (%p273) target = $region36
        $region35: #{tpu_custom_call.1} parent=31 // pred_region
          %s276 = sand.u32 %s48, 1
          %s277 = scalar_lea.sflag [#allocation3], %s276
          %s278 = sand.u32 %s48, 1
          %s279 = smul.addr %s278, 8
          %s280 = scalar_lea.vmem [#allocation2], %s279
          %s282 = ssub.s32 128, 128
          %283 = vsyncadd %s277, %s282
          %s284 = sadd.s32 %s32, %s31
          %s285 = smul.addr %s284, 128
          %s286 = scalar_lea.hbm %s0, %s285
          %s288 = sshll.u32 %s280, 4
          %s289 = int_to_ptr.vmem [resolvable:$true] %s288
          %291 = dma.hbm_to_vmem [thread:$0]  %s286, 128, %s289, %s277
        $region36: #{tpu_custom_call.1} parent=31 // pred_fallthru
          _
      $region32: #{tpu_custom_call.1} parent=5 // pred_fallthru
        _
      %p292 = scmp.le.s32.totalorder 1, %s24
      %p293 = scmp.lt.s32.totalorder %s24, 3
      %p294 = pnand %p292, %p293
      %p295 = pneg %p294
      // Predicated region
      $region37: #{tpu_custom_call.1} parent=5 // pred_check
        _
      $region38: #{tpu_custom_call.1} parent=5 // pred_check_branch
        %297 = sbr.rel (%p294) target = $region40
      $region39: #{tpu_custom_call.1} parent=5 // pred_region
        %s298 = ssub.s32 %s24, 1
        %s299 = sand.u32 %s51, 1
        %s300 = scalar_lea.sflag [#allocation3], %s299
        %s301 = sand.u32 %s51, 1
        %s302 = smul.addr %s301, 8
        %s303 = scalar_lea.vmem [#allocation2], %s302
        // Predicated region
        $region41: #{tpu_custom_call.1} parent=39 // pred_check
          %p304 = pneg %p64
        $region42: #{tpu_custom_call.1} parent=39 // pred_check_branch
          %306 = sbr.rel (%p304) target = $region44
        $region43: #{tpu_custom_call.1} parent=39 // pred_region
          %307 = dma.done %s300, 128
        $region44: #{tpu_custom_call.1} parent=39 // pred_fallthru
          _
        // Predicated region
        $region45: #{tpu_custom_call.1} parent=39 // pred_check
          %p308 = pneg %p127
        $region46: #{tpu_custom_call.1} parent=39 // pred_check_branch
          %310 = sbr.rel (%p308) target = $region48
        $region47: #{tpu_custom_call.1} parent=39 // pred_region
          %311 = dma.done [#allocation6], 512
        $region48: #{tpu_custom_call.1} parent=39 // pred_fallthru
          _
        %s312 = sand.u32 %s51, 1
        %s313 = scalar_lea.sflag [#allocation3], %s312
        %s314 = sand.u32 %s51, 1
        %s315 = smul.addr %s314, 8
        %s316 = scalar_lea.vmem [#allocation2], %s315
        %p317 = pneg %p64
        %p318 = pneg %p61
        %p319 = pneg %p85
        %p320 = pneg %p82
        %p321 = pneg %p106
        %p322 = pneg %p103
        %p323 = pneg %p127
        %p324 = pneg %p124
        %p325 = pneg %p148
        %p326 = pneg %p145
        %p327 = pneg %p176
        %p328 = pneg %p173
        %s329 = sand.u32 %s163, 1
        %s330 = scalar_lea.sflag [#allocation4], %s329
        %s331 = sand.u32 %s163, 1
        %s332 = smul.addr %s331, 32
        %s333 = scalar_lea.vmem [#allocation7], %s332
        %p334 = pneg %p204
        %p335 = pneg %p201
        %s336 = sand.u32 %s29, 1
        %s337 = scalar_lea.sflag [#allocation9], %s336
        %s338 = sand.u32 %s191, 1
        %s339 = smul.addr %s338, 32
        %s340 = scalar_lea.vmem [#allocation8], %s339
        %p341 = pneg %p232
        %p342 = pneg %p229
        %s343 = sand.u32 %s29, 1
        %s344 = scalar_lea.sflag [#allocation9], %s343
        %s345 = sand.u32 %s219, 1
        %s346 = smul.addr %s345, 32
        %s347 = scalar_lea.vmem [#allocation10], %s346
        %v348 = vld [vmem:[%s303] sm:$0xff]
        %v349 = vld [vmem:[%s1] sm:$0x1]
        %v350 = vld [vmem:[%s2] sm:$0x1]
        %vm351 = vcmask 261120
        %v352 = vsel %vm351, %v348, 0.0
        %353 = vadd.xlane.f32.xlu0 %v352
        %v354 = vpop.xlane.xlu0 %353
        %v355 = vrcp.pop 32.0
        %v356 = vmul.f32 %v354, %v355
        %v357 = vsub.f32 %v348, %v356
        %v358 = vmul.f32 %v357, %v357
        %v359 = vsel %vm351, %v358, 0.0
        %360 = vadd.xlane.f32.xlu0 %v359
        %v361 = vpop.xlane.xlu0 %360
        %v362 = vmul.f32 %v361, %v355
        %v363 = vadd.f32 %v362, 1e-06
        %v364 = vrsqrt.pop %v363
        %v365 = vmul.f32 %v357, %v364
        %v367 = vlaneseq
        %v368 = vshrl.u32 %v367, 7
        %v369 = vsub.s32 0, %v368
        %v370 = vrot.slane %v349, %v369
        %v372 = vmul.f32 %v365, %v370
        %v374 = vlaneseq
        %v375 = vshrl.u32 %v374, 7
        %v376 = vsub.s32 0, %v375
        %v377 = vrot.slane %v350, %v376
        %v379 = vadd.f32 %v372, %v377
        %v380 = vld [vmem:[#allocation5] sm:$0xff]
        %v381 = vld [vmem:[#allocation5 + $0x8] sm:$0xff]
        %v382 = vld [vmem:[#allocation5 + $0x10] sm:$0xff]
        %v383 = vld [vmem:[#allocation5 + $0x18] sm:$0xff]
        %v384 = vld [vmem:[%s4] sm:$0x1]
        %v386 = vlaneseq
        %v387 = vshrl.u32 %v386, 7
        %v388 = vsub.s32 0, %v387
        %v389 = vrot.slane %v384, %v388
        %v392 = vsel %vm351, %v379, 0
        %394 = vmatprep.subr.mxu0 0.0
        %395 = vmatpush1.msra.mxu0 %v380
        %396 = vmatprep.subr.mxu0 0.0
        %397 = vmatpush1.msra.mxu0 %v381
        %398 = vmatprep.subr.mxu0 0.0
        %399 = vmatpush1.msra.mxu0 %v382
        %400 = vmatprep.subr.mxu0 0.0
        %401 = vmatpush1.msra.mxu0 %v383
        %402 = vmatprep.subr.mxu0 0.0
        %403 = vmatpush1.msra.mxu0 0.0
        %404 = vmatprep.subr.mxu0 0.0
        %405 = vmatpush1.msra.mxu0 0.0
        %406 = vmatprep.subr.mxu0 0.0
        %407 = vmatpush1.msra.mxu0 0.0
        %408 = vmatprep.subr.mxu0 0.0
        %409 = vmatpush1.msra.mxu0 0.0
        %410 = vmatprep.subr.mxu0 0.0
        %411 = vmatpush1.msra.mxu0 0.0
        %412 = vmatprep.subr.mxu0 0.0
        %413 = vmatpush1.msra.mxu0 0.0
        %414 = vmatprep.subr.mxu0 0.0
        %415 = vmatpush1.msra.mxu0 0.0
        %416 = vmatprep.subr.mxu0 0.0
        %417 = vmatpush1.msra.mxu0 0.0
        %418 = vmatprep.subr.mxu0 0.0
        %419 = vmatpush1.msra.mxu0 0.0
        %420 = vmatprep.subr.mxu0 0.0
        %421 = vmatpush1.msra.mxu0 0.0
        %422 = vmatprep.subr.mxu0 0.0
        %423 = vmatpush1.msra.mxu0 0.0
        %424 = vmatprep.subr.mxu0 0.0
        %425 = vmatpush1.msra.mxu0 0.0
        %426 = vmatprep.subr.mxu0 0.0
        %427 = vmatpush1.msra.mxu0 0.0
        %428 = vmatprep.subr.mxu0 0.0
        %429 = vmatpush1.msra.mxu0 0.0
        %430 = vmatprep.subr.mxu0 0.0
        %431 = vmatpush1.msra.mxu0 0.0
        %432 = vmatprep.subr.mxu0 0.0
        %433 = vmatpush1.msra.mxu0 0.0
        %434 = vmatprep.subr.mxu0 0.0
        %435 = vmatpush1.msra.mxu0 0.0
        %436 = vmatprep.subr.mxu0 0.0
        %437 = vmatpush1.msra.mxu0 0.0
        %438 = vmatprep.subr.mxu0 0.0
        %439 = vmatpush1.msra.mxu0 0.0
        %440 = vmatprep.subr.mxu0 0.0
        %441 = vmatpush1.msra.mxu0 0.0
        %442 = vmatprep.subr.mxu0 0.0
        %443 = vmatpush1.msra.mxu0 0.0
        %444 = vmatprep.subr.mxu0 0.0
        %445 = vmatpush1.msra.mxu0 0.0
        %446 = vmatprep.subr.mxu0 0.0
        %447 = vmatpush1.msra.mxu0 0.0
        %448 = vmatprep.subr.mxu0 0.0
        %449 = vmatpush1.msra.mxu0 0.0
        %450 = vmatprep.subr.mxu0 0.0
        %451 = vmatpush1.msra.mxu0 0.0
        %452 = vmatprep.subr.mxu0 0.0
        %453 = vmatpush1.msra.mxu0 0.0
        %454 = vmatprep.subr.mxu0 0.0
        %455 = vmatpush1.msra.mxu0 0.0
        %456 = vmatprep.subr.mxu0 0.0
        %457 = vmatpush1.msra.mxu0 0.0
        %458 = vmatprep.mubr.f32.mxu0 0.0
        %459 = vmatmul.mubr.f32.gmra.mrb[0].mxu0 %v392
        %v460 = vpop.f32.mrb[0].mxu0
        %v461 = vadd.f32 %v389, %v460
        %v462 = vpop.f32.mrb[0].mxu0
        %463 = vdwg.mxu0
        %vm464 = vcmask 64512
        %465 = vst.msk [vmem:[%s333] sm:$0xff] %vm464, %v461
        %467 = vrot.lane.b32.xlu0 %v461, 96
        %v468 = vpop.permute.xlu0 %467
        %470 = vst.msk [vmem:[%s340] sm:$0xff] %vm464, %v468
        %471 = vrot.lane.b32.xlu0 %v461, 64
        %v472 = vpop.permute.xlu0 %471
        %474 = vst.msk [vmem:[%s347] sm:$0xff] %vm464, %v472
        %475 = vrot.lane.b32.xlu0 %v461, 120
        %v476 = vpop.permute.xlu0 %475
        %s478 = scalar_lea.vmem %s333, 8 [#allocation7]
        %479 = vst.msk [vmem:[%s478] sm:$0xff] %vm464, %v476
        %480 = vrot.lane.b32.xlu0 %v461, 88
        %v481 = vpop.permute.xlu0 %480
        %s483 = scalar_lea.vmem %s340, 8 [#allocation8]
        %484 = vst.msk [vmem:[%s483] sm:$0xff] %vm464, %v481
        %485 = vrot.lane.b32.xlu0 %v461, 56
        %v486 = vpop.permute.xlu0 %485
        %s488 = scalar_lea.vmem %s347, 8 [#allocation10]
        %489 = vst.msk [vmem:[%s488] sm:$0xff] %vm464, %v486
        %490 = vrot.lane.b32.xlu0 %v461, 112
        %v491 = vpop.permute.xlu0 %490
        %s493 = scalar_lea.vmem %s333, 16 [#allocation7]
        %494 = vst.msk [vmem:[%s493] sm:$0xff] %vm464, %v491
        %495 = vrot.lane.b32.xlu0 %v461, 80
        %v496 = vpop.permute.xlu0 %495
        %s498 = scalar_lea.vmem %s340, 16 [#allocation8]
        %499 = vst.msk [vmem:[%s498] sm:$0xff] %vm464, %v496
        %500 = vrot.lane.b32.xlu0 %v461, 48
        %v501 = vpop.permute.xlu0 %500
        %s503 = scalar_lea.vmem %s347, 16 [#allocation10]
        %504 = vst.msk [vmem:[%s503] sm:$0xff] %vm464, %v501
        %505 = vrot.lane.b32.xlu0 %v461, 104
        %v506 = vpop.permute.xlu0 %505
        %s508 = scalar_lea.vmem %s333, 24 [#allocation7]
        %509 = vst.msk [vmem:[%s508] sm:$0xff] %vm464, %v506
        %510 = vrot.lane.b32.xlu0 %v461, 72
        %v511 = vpop.permute.xlu0 %510
        %s513 = scalar_lea.vmem %s340, 24 [#allocation8]
        %514 = vst.msk [vmem:[%s513] sm:$0xff] %vm464, %v511
        %515 = vrot.lane.b32.xlu0 %v461, 40
        %v516 = vpop.permute.xlu0 %515
        %s518 = scalar_lea.vmem %s347, 24 [#allocation10]
        %519 = vst.msk [vmem:[%s518] sm:$0xff] %vm464, %v516
        %s520 = sand.u32 %s163, 1
        %s521 = scalar_lea.sflag [#allocation4], %s520
        %s522 = sand.u32 %s163, 1
        %s523 = smul.addr %s522, 32
        %s524 = scalar_lea.vmem [#allocation7], %s523
        %s525 = sand.u32 %s29, 1
        %s526 = scalar_lea.sflag [#allocation9], %s525
        %s527 = sand.u32 %s191, 1
        %s528 = smul.addr %s527, 32
        %s529 = scalar_lea.vmem [#allocation8], %s528
        %s530 = sand.u32 %s29, 1
        %s531 = scalar_lea.sflag [#allocation9], %s530
        %s532 = sand.u32 %s219, 1
        %s533 = smul.addr %s532, 32
        %s534 = scalar_lea.vmem [#allocation10], %s533
        // Predicated region
        $region49: #{tpu_custom_call.1} parent=39 // pred_check
          %p535 = pneg %p173
        $region50: #{tpu_custom_call.1} parent=39 // pred_check_branch
          %537 = sbr.rel (%p535) target = $region52
        $region51: #{tpu_custom_call.1} parent=39 // pred_region
          %s539 = ssub.s32 512, 512
          %540 = vsyncadd %s521, %s539
          %s541 = smul.addr %s33, 4
          %s542 = sadd.s32 %s34, %s541
          %s543 = smul.addr %s542, 128
          %s544 = scalar_lea.hbm %s5, %s543
          %s545 = sshll.u32 %s524, 4
          %s546 = int_to_ptr.vmem [resolvable:$true] %s545
          %551 = dma.vmem_to_hbm [thread:$0]  %s546, 512, %s544, %s521, 128, 128, 8
        $region52: #{tpu_custom_call.1} parent=39 // pred_fallthru
          _
        // Predicated region
        $region53: #{tpu_custom_call.1} parent=39 // pred_check
          %p552 = pneg %p201
        $region54: #{tpu_custom_call.1} parent=39 // pred_check_branch
          %554 = sbr.rel (%p552) target = $region56
        $region55: #{tpu_custom_call.1} parent=39 // pred_region
          %s556 = ssub.s32 512, 512
          %557 = vsyncadd %s526, %s556
          %s558 = smul.addr %s33, 4
          %s559 = sadd.s32 %s34, %s558
          %s560 = smul.addr %s559, 128
          %s561 = scalar_lea.hbm %s6, %s560
          %s562 = sshll.u32 %s529, 4
          %s563 = int_to_ptr.vmem [resolvable:$true] %s562
          %568 = dma.vmem_to_hbm [thread:$0]  %s563, 512, %s561, %s526, 128, 128, 8
        $region56: #{tpu_custom_call.1} parent=39 // pred_fallthru
          _
        // Predicated region
        $region57: #{tpu_custom_call.1} parent=39 // pred_check
          %p569 = pneg %p229
        $region58: #{tpu_custom_call.1} parent=39 // pred_check_branch
          %571 = sbr.rel (%p569) target = $region60
        $region59: #{tpu_custom_call.1} parent=39 // pred_region
          %s573 = ssub.s32 512, 512
          %574 = vsyncadd %s531, %s573
          %s575 = smul.addr %s33, 4
          %s576 = sadd.s32 %s34, %s575
          %s577 = smul.addr %s576, 128
          %s578 = scalar_lea.hbm %s7, %s577
          %s579 = sshll.u32 %s534, 4
          %s580 = int_to_ptr.vmem [resolvable:$true] %s579
          %585 = dma.vmem_to_hbm [thread:$0]  %s580, 512, %s578, %s531, 128, 128, 8
        $region60: #{tpu_custom_call.1} parent=39 // pred_fallthru
          _
      $region40: #{tpu_custom_call.1} parent=5 // pred_fallthru
        _
      %p586 = scmp.le.s32.totalorder 2, %s24
      // Predicated region
      $region61: #{tpu_custom_call.1} parent=5 // pred_check
        %p587 = pneg %p586
      $region62: #{tpu_custom_call.1} parent=5 // pred_check_branch
        %589 = sbr.rel (%p587) target = $region64
      $region63: #{tpu_custom_call.1} parent=5 // pred_region
        %s590 = ssub.s32 %s24, 2
        // Predicated region
        $region65: #{tpu_custom_call.1} parent=63 // pred_check
          %p591 = pneg %p179
        $region66: #{tpu_custom_call.1} parent=63 // pred_check_branch
          %593 = sbr.rel (%p591) target = $region68
        $region67: #{tpu_custom_call.1} parent=63 // pred_region
          %s594 = sand.u32 %s164, 1
          %s595 = scalar_lea.sflag [#allocation4], %s594
          %s596 = sand.u32 %s164, 1
          %s597 = smul.addr %s596, 32
          %s598 = scalar_lea.vmem [#allocation7], %s597
          %599 = dma.done %s595, 512
        $region68: #{tpu_custom_call.1} parent=63 // pred_fallthru
          _
        // Predicated region
        $region69: #{tpu_custom_call.1} parent=63 // pred_check
          %p600 = pneg %p207
        $region70: #{tpu_custom_call.1} parent=63 // pred_check_branch
          %602 = sbr.rel (%p600) target = $region72
        $region71: #{tpu_custom_call.1} parent=63 // pred_region
          %s603 = sand.u32 %s30, 1
          %s604 = scalar_lea.sflag [#allocation9], %s603
          %s605 = sand.u32 %s192, 1
          %s606 = smul.addr %s605, 32
          %s607 = scalar_lea.vmem [#allocation8], %s606
          %608 = dma.done %s604, 512
        $region72: #{tpu_custom_call.1} parent=63 // pred_fallthru
          _
        // Predicated region
        $region73: #{tpu_custom_call.1} parent=63 // pred_check
          %p609 = pneg %p235
        $region74: #{tpu_custom_call.1} parent=63 // pred_check_branch
          %611 = sbr.rel (%p609) target = $region76
        $region75: #{tpu_custom_call.1} parent=63 // pred_region
          %s612 = sand.u32 %s30, 1
          %s613 = scalar_lea.sflag [#allocation9], %s612
          %s614 = sand.u32 %s220, 1
          %s615 = smul.addr %s614, 32
          %s616 = scalar_lea.vmem [#allocation10], %s615
          %617 = dma.done %s613, 512
        $region76: #{tpu_custom_call.1} parent=63 // pred_fallthru
          _
      $region64: #{tpu_custom_call.1} parent=5 // pred_fallthru
        _
    $region6: #{tpu_custom_call.1} parent=1 // loop_footer
      %s28 = sadd.s32 1, %s24
    $region7: #{tpu_custom_call.1} parent=1 // loop_footer_branch
      %23 = sbr.rel target = $region3
    $region8: #{tpu_custom_call.1} parent=1 // loop_exit
      _
    %618 = vsyncpa [#allocation3], 1
    %s619 = scalar_lea.sflag [#allocation3], 1
    %620 = vsyncpa %s619, 1
    %621 = vsyncpa [#allocation6], 1
    %622 = vsyncpa [#allocation4], 1
    %s623 = scalar_lea.sflag [#allocation4], 1
    %624 = vsyncpa %s623, 1
    %625 = vsyncpa [#allocation9], 1
    %s626 = scalar_lea.sflag [#allocation9], 1
    %627 = vsyncpa %s626, 1

</llo_original>
